<compile_context>
chip_gen: v5e
topology: v5e:2x2
jax: 0.10.0
libtpu: 0.0.40
codegen_flags: <defaults>
</compile_context>

<pallas_src>
import jax
import jax.numpy as jnp
from jax import lax
from jax.experimental import pallas as pl
from jax.experimental.pallas import tpu as pltpu

MAX_POS = 252


def _round_up(n, m):
    return ((n + m - 1) // m) * m


def _pos_add_kernel(pos_ref, x_ref, emb_ref, o_ref):
    # pos_ref: (TM, 1) int32 VMEM tile of position indices for this row tile
    # x_ref:   (TM, D)  input rows
    # emb_ref: (K_PAD, D) full (padded) embedding table, VMEM-resident
    # o_ref:   (TM, D)  output rows
    tm = x_ref.shape[0]
    k = emb_ref.shape[0]
    # One-hot gather on the MXU: (TM, K) @ (K, D) -> (TM, D)
    iota = lax.broadcasted_iota(jnp.int32, (tm, k), 1)
    one_hot = (pos_ref[...] == iota).astype(emb_ref.dtype)
    gathered = jnp.dot(one_hot, emb_ref[...], preferred_element_type=jnp.float32)
    o_ref[...] = x_ref[...] + gathered.astype(o_ref.dtype)


def learned_position_encoding(x, pos, emb_table, *, tm=256):
    """x: (S, B, D) float; pos: (B, S) int; emb_table: (MAX_POS, D) float."""
    S, B, D = x.shape
    N = S * B

    # Flatten so flat row i corresponds to (s = i // B, b = i % B), matching
    # embedding(pos).transpose(0, 1) added to seq-first x.
    x_flat = x.reshape(N, D)
    pos_flat = jnp.transpose(pos, (1, 0)).reshape(N, 1).astype(jnp.int32)
    # Graceful handling of out-of-range indices.
    pos_flat = jnp.clip(pos_flat, 0, MAX_POS - 1)

    # Tile size: multiple of 8 sublanes, capped at the (padded) row count.
    tm = min(tm, _round_up(N, 8))
    n_pad = _round_up(N, tm)
    if n_pad != N:
        x_flat = jnp.pad(x_flat, ((0, n_pad - N), (0, 0)))
        pos_flat = jnp.pad(pos_flat, ((0, n_pad - N), (0, 0)))  # pads with idx 0

    # Pad table rows to a multiple of 8 (252 -> 256); padded rows are zero and
    # never selected because pos is clamped to < MAX_POS.
    k_pad = _round_up(MAX_POS, 8)
    emb_pad = emb_table
    if k_pad != emb_table.shape[0]:
        emb_pad = jnp.pad(emb_table, ((0, k_pad - emb_table.shape[0]), (0, 0)))

    grid = (n_pad // tm,)

    out_flat = pl.pallas_call(
        _pos_add_kernel,
        out_shape=jax.ShapeDtypeStruct((n_pad, D), x.dtype),
        grid=grid,
        in_specs=[
            # per-tile position indices
            pl.BlockSpec((tm, 1), lambda i: (i, 0)),
            # per-tile input rows
            pl.BlockSpec((tm, D), lambda i: (i, 0)),
            # full embedding table, constant block index -> stays VMEM-resident
            pl.BlockSpec((k_pad, D), lambda i: (0, 0)),
        ],
        out_specs=pl.BlockSpec((tm, D), lambda i: (i, 0)),
        compiler_params=pltpu.CompilerParams(
            dimension_semantics=("parallel",)),
    )(pos_flat, x_flat, emb_pad)

    # TODO(synk): nn.Dropout(p=0.1) is identity in eval mode; training-mode
    # stochastic dropout (pltpu.prng_*) not implemented here.
    return out_flat[:N].reshape(S, B, D)


if __name__ == "__main__":
    key = jax.random.PRNGKey(0)
    k_emb, k_x, k_pos = jax.random.split(key, 3)

    D = 32   # d_model
    S = 8    # sequence length
    B = 2    # batch

    # Deterministic parameter init (nn.Embedding(max_pos, d_model, padding_idx=0))
    emb_table = jax.random.normal(k_emb, (MAX_POS, D), jnp.float32)
    emb_table = emb_table.at[0].set(0.0)  # padding_idx=0 -> zero row

    x = jax.random.normal(k_x, (S, B, D), jnp.float32)
    pos = jax.random.randint(k_pos, (B, S), 0, MAX_POS, dtype=jnp.int32)

    out = learned_position_encoding(x, pos, emb_table)
    out = jax.block_until_ready(out)

    # Reference: x + embedding(pos).transpose(0, 1)
    ref = x + jnp.transpose(emb_table[pos], (1, 0, 2))
    assert out.shape == (S, B, D)
    assert jnp.allclose(out, ref, atol=1e-5), "mismatch vs reference"

    print("KERNEL_OK")
</pallas_src>

<mosaic_0001>
module attributes {stable_mosaic.version = 11 : i64} {
  func.func @_pos_add_kernel(%arg0: i32, %arg1: memref<16x1xi32, #tpu.memory_space<vmem>>, %arg2: memref<16x32xf32, #tpu.memory_space<vmem>>, %arg3: memref<256x32xf32, #tpu.memory_space<vmem>>, %arg4: memref<16x32xf32, #tpu.memory_space<vmem>>) attributes {dimension_semantics = [#tpu.dimension_semantics<parallel>], iteration_bounds = array<i64: 1>, scalar_prefetch = 0 : i64, scratch_operands = 0 : i64, tpu.core_type = #tpu.core_type<tc>, window_params = [{transform_indices = @transform_0, window_bounds = array<i64: 16, 1>}, {transform_indices = @transform_1, window_bounds = array<i64: 16, 32>}, {pipeline_mode = #tpu.pipeline_mode<synchronous>, transform_indices = @transform_2, window_bounds = array<i64: 256, 32>}, {transform_indices = @transform_3, window_bounds = array<i64: 16, 32>}]} {
    %0 = tpu.iota {dimensions = array<i32: 1>} : vector<16x256xi32>
    %c0 = arith.constant 0 : index
    %c0_0 = arith.constant 0 : index
    %1 = vector.load %arg1[%c0, %c0_0] : memref<16x1xi32, #tpu.memory_space<vmem>>, vector<16x1xi32>
    %2 = vector.broadcast %1 : vector<16x1xi32> to vector<16x256xi32>
    %3 = arith.cmpi eq, %2, %0 : vector<16x256xi32>
    %4 = arith.extui %3 : vector<16x256xi1> to vector<16x256xi32>
    %5 = arith.sitofp %4 : vector<16x256xi32> to vector<16x256xf32>
    %c0_1 = arith.constant 0 : index
    %c0_2 = arith.constant 0 : index
    %6 = vector.load %arg3[%c0_1, %c0_2] : memref<256x32xf32, #tpu.memory_space<vmem>>, vector<256x32xf32>
    %cst = arith.constant dense<0.000000e+00> : vector<16x32xf32>
    %7 = tpu.matmul %5, %6, %cst {dimension_numbers = #tpu.dot_dimension_numbers<[1], [0], [0], [1], [0, 0, 1, 1], [], []>} : vector<16x256xf32>, vector<256x32xf32>, vector<16x32xf32> -> vector<16x32xf32>
    %c0_3 = arith.constant 0 : index
    %c0_4 = arith.constant 0 : index
    %8 = vector.load %arg2[%c0_3, %c0_4] : memref<16x32xf32, #tpu.memory_space<vmem>>, vector<16x32xf32>
    %9 = arith.addf %8, %7 : vector<16x32xf32>
    %c0_5 = arith.constant 0 : index
    %c0_6 = arith.constant 0 : index
    %10 = vector.load %arg4[%c0_5, %c0_6] : memref<16x32xf32, #tpu.memory_space<vmem>>, vector<16x32xf32>
    tpu.vector_store %arg4[%c0_5, %c0_6], %9 {strides = array<i32>} : memref<16x32xf32, #tpu.memory_space<vmem>>, vector<16x32xf32>,
    return
  }
  func.func @transform_0(%arg0: i32) -> (i32, i32) {
    %c0_i32 = arith.constant 0 : i32
    %c0_i32_0 = arith.constant 0 : i32
    return %arg0, %c0_i32 : i32, i32
  }
  func.func @transform_1(%arg0: i32) -> (i32, i32) {
    %c0_i32 = arith.constant 0 : i32
    %c0_i32_0 = arith.constant 0 : i32
    return %arg0, %c0_i32 : i32, i32
  }
  func.func @transform_2(%arg0: i32) -> (i32, i32) {
    %c0_i32 = arith.constant 0 : i32
    %c0_i32_0 = arith.constant 0 : i32
    %c0_i32_1 = arith.constant 0 : i32
    return %c0_i32, %c0_i32_0 : i32, i32
  }
  func.func @transform_3(%arg0: i32) -> (i32, i32) {
    %c0_i32 = arith.constant 0 : i32
    %c0_i32_0 = arith.constant 0 : i32
    return %arg0, %c0_i32 : i32, i32
  }
}

</mosaic_0001>

<llo_original>
// kernel: tpu_custom_call.1
$region0: #{tpu_custom_call.1}
  #allocation0 [shape = 'u32[]', space=smem, size = 0x4, offset = 0x4, fixed_abs, tag = 'smem constant byte address 0x4 - core index']
  #allocation1 [shape = 'u32[72,128]{1,0:T(1,128)}', space=vmem, size = 0x9000, scoped, tag = 'internal scratch']
  %s0 = inlined_call_operand.vmem [shape: s32[16,1], index: 0, kind: input, shape index: {}]
  %s1 = inlined_call_operand.vmem [shape: f32[16,32], index: 1, kind: input, shape index: {}]
  %s2 = inlined_call_operand.vmem [shape: f32[256,32], index: 2, kind: input, shape index: {}]
  %s3 = inlined_call_operand.hbm [shape: f32[16,32], index: 3, kind: output, shape index: {}]
  %s4 = sld [smem:[#allocation0]]
  $region22: #{tpu_custom_call.1} parent=0
    _
  %s6 = ssub.s32 1, %s4
  %s7 = scalar_select 0, %s6, %s4
  $region1: #{tpu_custom_call.1} parent=0
    #allocation2 [shape = 'u8[8192]{0}', space=vmem, size = 0x2000, scoped, tag = 'output window, operand 0, single buffered']
    #allocation3 [shape = 's32[1]{0}', space=sflag, size = 0x4, scoped, tag = 'scoped memory for tpu_custom_call.1']
    %8 = vsyncpa [#allocation3], 0
    // Predicated region
    $region2: #{tpu_custom_call.1} parent=1 // pred_check
      _
    $region3: #{tpu_custom_call.1} parent=1 // pred_check_branch
      %10 = sbr.rel (0) target = $region5
    $region4: #{tpu_custom_call.1} parent=1 // pred_region
      _
    $region5: #{tpu_custom_call.1} parent=1 // pred_fallthru
      _
    // Predicated region
    $region6: #{tpu_custom_call.1} parent=1 // pred_check
      _
    $region7: #{tpu_custom_call.1} parent=1 // pred_check_branch
      %12 = sbr.rel (0) target = $region9
    $region8: #{tpu_custom_call.1} parent=1 // pred_region
      _
    $region9: #{tpu_custom_call.1} parent=1 // pred_fallthru
      _
    // Predicated region
    $region10: #{tpu_custom_call.1} parent=1 // pred_check
      _
    $region11: #{tpu_custom_call.1} parent=1 // pred_check_branch
      %14 = sbr.rel (0) target = $region13
    $region12: #{tpu_custom_call.1} parent=1 // pred_region
      _
    $region13: #{tpu_custom_call.1} parent=1 // pred_fallthru
      _
    %v15 = vlaneseq
    %v16 = vand.u32 %v15, 127
    %v17 = vadd.s32 %v16, 128
    %v18 = vld [vmem:[%s0] sm:$0xff]
    %v19 = vld [vmem:[%s0 + $0x8] sm:$0xff]
    %20 = vset.pattern.permute.xlu0 0
    %21 = vperm.xlu0 %20, %v18
    %v22 = vpop.permute.xlu0 %21
    %23 = vset.pattern.permute.xlu0 0
    %24 = vperm.xlu0 %23, %v19
    %v25 = vpop.permute.xlu0 %24
    %vm26 = vcmp.eq.s32.totalorder %v22, %v16
    %vm27 = vcmp.eq.s32.totalorder %v22, %v17
    %vm28 = vcmp.eq.s32.totalorder %v25, %v16
    %vm29 = vcmp.eq.s32.totalorder %v25, %v17
    %v30 = vsel %vm26, 1, 0
    %v31 = vsel %vm27, 1, 0
    %v32 = vsel %vm28, 1, 0
    %v33 = vsel %vm29, 1, 0
    %v34 = vcvt.s32.f32 %v30
    %v35 = vcvt.s32.f32 %v31
    %v36 = vcvt.s32.f32 %v32
    %v37 = vcvt.s32.f32 %v33
    %v38 = vld [vmem:[%s2] sm:$0xff]
    %v39 = vld [vmem:[%s2 + $0x8] sm:$0xff]
    %v40 = vld [vmem:[%s2 + $0x10] sm:$0xff]
    %v41 = vld [vmem:[%s2 + $0x18] sm:$0xff]
    %v42 = vld [vmem:[%s2 + $0x20] sm:$0xff]
    %v43 = vld [vmem:[%s2 + $0x28] sm:$0xff]
    %v44 = vld [vmem:[%s2 + $0x30] sm:$0xff]
    %v45 = vld [vmem:[%s2 + $0x38] sm:$0xff]
    %v46 = vld [vmem:[%s2 + $0x40] sm:$0xff]
    %v47 = vld [vmem:[%s2 + $0x48] sm:$0xff]
    %v48 = vld [vmem:[%s2 + $0x50] sm:$0xff]
    %v49 = vld [vmem:[%s2 + $0x58] sm:$0xff]
    %v50 = vld [vmem:[%s2 + $0x60] sm:$0xff]
    %v51 = vld [vmem:[%s2 + $0x68] sm:$0xff]
    %v52 = vld [vmem:[%s2 + $0x70] sm:$0xff]
    %v53 = vld [vmem:[%s2 + $0x78] sm:$0xff]
    %v54 = vld [vmem:[%s2 + $0x80] sm:$0xff]
    %v55 = vld [vmem:[%s2 + $0x88] sm:$0xff]
    %v56 = vld [vmem:[%s2 + $0x90] sm:$0xff]
    %v57 = vld [vmem:[%s2 + $0x98] sm:$0xff]
    %v58 = vld [vmem:[%s2 + $0xa0] sm:$0xff]
    %v59 = vld [vmem:[%s2 + $0xa8] sm:$0xff]
    %v60 = vld [vmem:[%s2 + $0xb0] sm:$0xff]
    %v61 = vld [vmem:[%s2 + $0xb8] sm:$0xff]
    %v62 = vld [vmem:[%s2 + $0xc0] sm:$0xff]
    %v63 = vld [vmem:[%s2 + $0xc8] sm:$0xff]
    %v64 = vld [vmem:[%s2 + $0xd0] sm:$0xff]
    %v65 = vld [vmem:[%s2 + $0xd8] sm:$0xff]
    %v66 = vld [vmem:[%s2 + $0xe0] sm:$0xff]
    %v67 = vld [vmem:[%s2 + $0xe8] sm:$0xff]
    %v68 = vld [vmem:[%s2 + $0xf0] sm:$0xff]
    %v69 = vld [vmem:[%s2 + $0xf8] sm:$0xff]
    %70 = vmatpush.msra.mxu0 %v53
    %71 = vmatpush.msra.mxu0 %v52
    %72 = vmatpush.msra.mxu0 %v51
    %73 = vmatpush.msra.mxu0 %v50
    %74 = vmatpush.msra.mxu0 %v49
    %75 = vmatpush.msra.mxu0 %v48
    %76 = vmatpush.msra.mxu0 %v47
    %77 = vmatpush.msra.mxu0 %v46
    %78 = vmatpush.msra.mxu0 %v45
    %79 = vmatpush.msra.mxu0 %v44
    %80 = vmatpush.msra.mxu0 %v43
    %81 = vmatpush.msra.mxu0 %v42
    %82 = vmatpush.msra.mxu0 %v41
    %83 = vmatpush.msra.mxu0 %v40
    %84 = vmatpush.msra.mxu0 %v39
    %85 = vmatpush.msra.mxu0 %v38
    %86 = vmatmul.f32.gmra.mxu0 %v34
    %v87 = vpop.f32.mrf.mxu0
    %v88 = vadd.f32 0.0, %v87
    %89 = vmatmul.f32.gmra.mxu0 %v36
    %v90 = vpop.f32.mrf.mxu0
    %v91 = vadd.f32 0.0, %v90
    %92 = vdwg.mxu0
    %93 = vmatpush.msra.mxu0 %v69
    %94 = vmatpush.msra.mxu0 %v68
    %95 = vmatpush.msra.mxu0 %v67
    %96 = vmatpush.msra.mxu0 %v66
    %97 = vmatpush.msra.mxu0 %v65
    %98 = vmatpush.msra.mxu0 %v64
    %99 = vmatpush.msra.mxu0 %v63
    %100 = vmatpush.msra.mxu0 %v62
    %101 = vmatpush.msra.mxu0 %v61
    %102 = vmatpush.msra.mxu0 %v60
    %103 = vmatpush.msra.mxu0 %v59
    %104 = vmatpush.msra.mxu0 %v58
    %105 = vmatpush.msra.mxu0 %v57
    %106 = vmatpush.msra.mxu0 %v56
    %107 = vmatpush.msra.mxu0 %v55
    %108 = vmatpush.msra.mxu0 %v54
    %109 = vmatmul.f32.gmra.mxu0 %v35
    %v110 = vpop.f32.mrf.mxu0
    %v111 = vadd.f32 %v88, %v110
    %112 = vmatmul.f32.gmra.mxu0 %v37
    %v113 = vpop.f32.mrf.mxu0
    %v114 = vadd.f32 %v91, %v113
    %115 = vdwg.mxu0
    %v116 = vld [vmem:[%s1] sm:$0xff]
    %v117 = vld [vmem:[%s1 + $0x8] sm:$0xff]
    %v118 = vadd.f32 %v116, %v111
    %v119 = vadd.f32 %v117, %v114
    %vm120 = vcmask 261120
    %121 = vst.msk [vmem:[#allocation2] sm:$0xff] %vm120, %v118
    %122 = vst.msk [vmem:[#allocation2 + $0x8] sm:$0xff] %vm120, %v119
    // Predicated region
    $region14: #{tpu_custom_call.1} parent=1 // pred_check
      _
    $region15: #{tpu_custom_call.1} parent=1 // pred_check_branch
      %124 = sbr.rel (0) target = $region17
    $region16: #{tpu_custom_call.1} parent=1 // pred_region
      %126 = vsyncadd [#allocation3], 0
      %s127 = sshll.u32 [#allocation2], 4
      %s128 = int_to_ptr.vmem [resolvable:$true] %s127
      %s129 = sshll.u32 %s3, 4
      %s130 = int_to_ptr.hbm [resolvable:$true] %s129
      %135 = dma.vmem_to_hbm [thread:$0]  %s128, 256, %s130, [#allocation3], 128, 128, 8
    $region17: #{tpu_custom_call.1} parent=1 // pred_fallthru
      _
    // Predicated region
    $region18: #{tpu_custom_call.1} parent=1 // pred_check
      _
    $region19: #{tpu_custom_call.1} parent=1 // pred_check_branch
      %137 = sbr.rel (0) target = $region21
    $region20: #{tpu_custom_call.1} parent=1 // pred_region
      %139 = dma.done [#allocation3], 256
    $region21: #{tpu_custom_call.1} parent=1 // pred_fallthru
      _
    %140 = vsyncpa [#allocation3], 1

</llo_original>
